<compile_context>
chip_gen: v7x
topology: tpu7x:2x2x1
jax: 0.10.0
libtpu: 0.0.40
codegen_flags: <defaults>
</compile_context>

<pallas_src>
import functools

import jax
import jax.numpy as jnp
from jax.experimental import pallas as pl
from jax.experimental.pallas import tpu as pltpu


def _neg_limit(dtype):
    """Finite 'minus infinity' for max-reductions (avoids -inf * 0 = NaN)."""
    if jnp.issubdtype(dtype, jnp.floating):
        return jnp.finfo(dtype).min
    return jnp.iinfo(dtype).min


def _temporal_maxer_kernel(x_ref, o_ref, *, kernel_size, stride, padding,
                           T, T_out):
    """One (batch, channel-tile) cell per grid step.

    x_ref : (1, T, c_tile)      input block (time on sublanes, channels on lanes)
    o_ref : (1, T_out, c_tile)  pooled output block (mask applied outside)
    """
    K, s, p = kernel_size, stride, padding
    x = x_ref[0]                       # (T, c_tile) contiguous load
    c_tile = x.shape[1]
    dt = x.dtype
    neg = _neg_limit(dt)

    # Rows of the "virtual padded signal" consumed below.
    G = T_out * s if s > 1 else T_out  # rows regrouped into (T_out, s) groups
    W = K - s + 1                      # per-row partial window width (K >= s)

    # xe[i] == x[i - p] for real rows, `neg` for the few boundary rows.
    # Only `p + tail` boundary rows are written (no full -inf pass, no scratch).
    need = G + W - 1
    tail = max(0, need - p - T)
    pieces = []
    if p > 0:
        pieces.append(jnp.full((p, c_tile), neg, dt))
    pieces.append(x)
    if tail > 0:
        pieces.append(jnp.full((tail, c_tile), neg, dt))
    xe = pieces[0] if len(pieces) == 1 else jnp.concatenate(pieces, axis=0)

    # Partial per-row window max with contiguous slabs (VPU maxima only):
    #   g[t] = max_{w < W} x[t + w - p]
    g = xe[0:G, :]
    for w in range(1, W):
        g = jnp.maximum(g, xe[w:w + G, :])

    if s == 1:
        pooled = g                                           # (T_out, c_tile)
    else:
        # Finish the window with a reshape-based reduction over the stride
        # groups (contiguous regrouping + sublane reduce, no strided loads):
        #   pooled[j] = max_{i < s} g[j*s + i] = max over window j
        pooled = jnp.max(g.reshape(T_out, s, c_tile), axis=1)

    o_ref[0] = pooled.astype(o_ref.dtype)


def _pick_c_tile(C, T, itemsize):
    """Largest 128-multiple channel tile dividing C that keeps the per-step
    VMEM footprint (double-buffered blocks + in-kernel temporaries) within a
    v7x-safe budget.  Falls back to the full channel dim if C % 128 != 0."""
    if C % 128 != 0:
        return C
    budget = 40 * 1024 * 1024
    for cand in (512, 384, 256, 128):
        if C % cand == 0 and 6 * T * cand * itemsize <= budget:
            return cand
    return 128


def temporal_maxer(x, mask, *, kernel_size=3, stride=2, padding=1):
    """x: (B, T, C) float, mask: (B, T). Returns (out (B,T_out,C), out_mask (B,T_out))."""
    B, T, C = x.shape
    K, s, p = kernel_size, stride, padding
    T_out = (T + 2 * p - K) // s + 1          # MaxPool1d output length

    if s > 1:
        # TODO(synk): kernel_size < stride (non-overlapping, skipping windows)
        # is not implemented in the fast path; never used by TemporalMaxer.
        assert K >= s, "temporal_maxer kernel requires kernel_size >= stride"
        # F.interpolate(mode='nearest') to size ceil(T / stride):
        # src_idx = floor(dst_idx * T / T_mask)
        T_mask = (T + s - 1) // s
        idx = (jnp.arange(T_mask) * T) // T_mask
        out_mask = mask[:, idx].astype(x.dtype)
    else:
        T_mask = T
        out_mask = mask
    assert T_mask == T_out, "pooled length must match interpolated mask length"

    itemsize = jnp.dtype(x.dtype).itemsize
    c_tile = _pick_c_tile(C, T, itemsize)
    n_c = C // c_tile

    kernel = functools.partial(
        _temporal_maxer_kernel,
        kernel_size=K, stride=s, padding=p, T=T, T_out=T_out)

    # Explicit VMEM budget (matters on v7x's 64 MiB): double-buffered in/out
    # blocks plus in-kernel temporaries, clamped to a safe range.
    blk_bytes = (T + T_out) * c_tile * itemsize
    vmem_limit = int(min(48 * 1024 * 1024, max(16 * 1024 * 1024, 8 * blk_bytes)))

    pooled = pl.pallas_call(
        kernel,
        out_shape=jax.ShapeDtypeStruct((B, T_out, C), x.dtype),
        grid_spec=pltpu.PrefetchScalarGridSpec(
            num_scalar_prefetch=0,
            grid=(B, n_c),
            in_specs=[pl.BlockSpec((1, T, c_tile), lambda b, c: (b, 0, c))],
            out_specs=pl.BlockSpec((1, T_out, c_tile), lambda b, c: (b, 0, c)),
        ),
        compiler_params=pltpu.CompilerParams(
            dimension_semantics=("parallel", "parallel"),
            vmem_limit_bytes=vmem_limit),
    )(x)

    # Mask multiply stays outside the kernel: XLA fuses this elementwise op
    # with the pallas_call output, and the (B, T_out) mask column never has
    # to be lane-padded / broadcast inside VMEM.
    out = pooled * out_mask.astype(x.dtype)[:, :, None]
    return out, out_mask


if __name__ == "__main__":
    import numpy as np

    def ref_temporal_maxer(xn, mn, K, s, p):
        """NumPy reference mirroring the PyTorch module."""
        B, T, C = xn.shape
        T_out = (T + 2 * p - K) // s + 1
        xp = np.full((B, T + 2 * p, C), -np.inf, dtype=np.float32)
        xp[:, p:p + T, :] = xn
        pool = np.stack(
            [xp[:, j * s:j * s + K, :].max(axis=1) for j in range(T_out)],
            axis=1)
        if s > 1:
            T_mask = (T + s - 1) // s
            idx = (np.arange(T_mask) * T) // T_mask
            m = mn[:, idx]
        else:
            m = mn
        return pool * m[:, :, None], m

    key = jax.random.PRNGKey(0)
    kx, _ = jax.random.split(key)

    # n_embd = 256 so the channel axis is lane-dense (multiple of 128).
    B, T, C = 2, 16, 256
    x = jax.random.normal(kx, (B, T, C), dtype=jnp.float32)
    lengths = jnp.array([16, 11])
    mask = (jnp.arange(T)[None, :] < lengths[:, None]).astype(jnp.float32)

    xn, mn = np.asarray(x), np.asarray(mask)

    # Config 1: the standard TemporalMaxer downsampling pool (k=3, s=2, p=1).
    out, out_mask = temporal_maxer(x, mask, kernel_size=3, stride=2, padding=1)
    out = jax.block_until_ready(out)
    out_mask = jax.block_until_ready(out_mask)
    ref_out, ref_mask = ref_temporal_maxer(xn, mn, 3, 2, 1)
    np.testing.assert_allclose(np.asarray(out), ref_out, rtol=1e-6, atol=1e-6)
    np.testing.assert_allclose(np.asarray(out_mask), ref_mask, rtol=0, atol=0)

    # Config 2: stride-1 path (k=3, s=1, p=1) exercises the no-downsample branch.
    out1, out_mask1 = temporal_maxer(x, mask, kernel_size=3, stride=1, padding=1)
    out1 = jax.block_until_ready(out1)
    out_mask1 = jax.block_until_ready(out_mask1)
    ref_out1, ref_mask1 = ref_temporal_maxer(xn, mn, 3, 1, 1)
    np.testing.assert_allclose(np.asarray(out1), ref_out1, rtol=1e-6, atol=1e-6)
    np.testing.assert_allclose(np.asarray(out_mask1), ref_mask1, rtol=0, atol=0)

    print("KERNEL_OK")
</pallas_src>

<mosaic_0001>
module attributes {stable_mosaic.version = 11 : i64} {
  func.func @_temporal_maxer_kernel(%arg0: i32, %arg1: i32, %arg2: memref<1x16x256xf32, #tpu.memory_space<vmem>>, %arg3: memref<1x8x256xf32, #tpu.memory_space<vmem>>) attributes {dimension_semantics = [#tpu.dimension_semantics<parallel>, #tpu.dimension_semantics<parallel>], iteration_bounds = array<i64: 2, 1>, scalar_prefetch = 0 : i64, scratch_operands = 0 : i64, tpu.core_type = #tpu.core_type<tc>, window_params = [{transform_indices = @transform_0, window_bounds = array<i64: 1, 16, 256>}, {transform_indices = @transform_1, window_bounds = array<i64: 1, 8, 256>}]} {
    %c0 = arith.constant 0 : index
    %c0_0 = arith.constant 0 : index
    %c0_1 = arith.constant 0 : index
    %0 = vector.load %arg2[%c0, %c0_0, %c0_1] : memref<1x16x256xf32, #tpu.memory_space<vmem>>, vector<1x16x256xf32>
    %1 = vector.shape_cast %0 : vector<1x16x256xf32> to vector<16x256xf32>
    %cst = arith.constant -3.40282347E+38 : f32
    %2 = vector.broadcast %cst : f32 to vector<1x256xf32>
    %3 = tpu.concatenate %2, %1 in 0 : vector<1x256xf32>, vector<16x256xf32> -> vector<17x256xf32>
    %4 = vector.extract_strided_slice %3 {offsets = [0, 0], sizes = [16, 256], strides = [1, 1]} : vector<17x256xf32> to vector<16x256xf32>
    %5 = vector.extract_strided_slice %3 {offsets = [1, 0], sizes = [16, 256], strides = [1, 1]} : vector<17x256xf32> to vector<16x256xf32>
    %6 = arith.maximumf %4, %5 : vector<16x256xf32>
    %7 = vector.shape_cast %6 : vector<16x256xf32> to vector<8x2x256xf32>
    %cst_2 = arith.constant dense<0xFF800000> : vector<8x256xf32>
    %8 = vector.multi_reduction <maximumf>, %7, %cst_2 [1] : vector<8x2x256xf32> to vector<8x256xf32>
    %c0_3 = arith.constant 0 : index
    %c0_4 = arith.constant 0 : index
    %c0_5 = arith.constant 0 : index
    %9 = vector.load %arg3[%c0_3, %c0_4, %c0_5] : memref<1x8x256xf32, #tpu.memory_space<vmem>>, vector<1x8x256xf32>
    %10 = vector.shape_cast %9 : vector<1x8x256xf32> to vector<8x256xf32>
    %11 = vector.shape_cast %8 : vector<8x256xf32> to vector<1x8x256xf32>
    tpu.vector_store %arg3[%c0_3, %c0_4, %c0_5], %11 {strides = array<i32>} : memref<1x8x256xf32, #tpu.memory_space<vmem>>, vector<1x8x256xf32>,
    return
  }
  func.func @transform_0(%arg0: i32, %arg1: i32) -> (i32, i32, i32) {
    %c0_i32 = arith.constant 0 : i32
    %c0_i32_0 = arith.constant 0 : i32
    return %arg0, %c0_i32, %arg1 : i32, i32, i32
  }
  func.func @transform_1(%arg0: i32, %arg1: i32) -> (i32, i32, i32) {
    %c0_i32 = arith.constant 0 : i32
    %c0_i32_0 = arith.constant 0 : i32
    return %arg0, %c0_i32, %arg1 : i32, i32, i32
  }
}

</mosaic_0001>

<llo_original>
// kernel: tpu_custom_call.1
$region0: #{tpu_custom_call.1}
  #allocation0 [shape = 'u32[]', space=smem, size = 0x4, offset = 0x4, fixed_abs, tag = 'smem constant byte address 0x4 - core index']
  #allocation1 [shape = 'u32[144,128]{1,0:T(1,128)}', space=vmem, size = 0x12000, scoped, tag = 'internal scratch']
  %s0 = inlined_call_operand.hbm [shape: f32[2,16,256], index: 0, kind: input, shape index: {}]
  %s1 = inlined_call_operand.hbm [shape: f32[2,8,256], index: 1, kind: output, shape index: {}]
  %s2 = sld [smem:[#allocation0]]
  $region41: #{tpu_custom_call.1} parent=0
    _
  %s4 = ssub.s32 1, %s2
  %s5 = scalar_select 0, %s4, %s2
  $region1: #{tpu_custom_call.1} parent=0
    #allocation2 [shape = 'u8[32768]{0}', space=vmem, size = 0x8000, scoped, tag = 'input window, operand 0']
    #allocation3 [shape = 's32[2]{0}', space=sflag, size = 0x8, scoped, tag = 'scoped memory for tpu_custom_call.1']
    #allocation4 [shape = 's32[2]{0}', space=sflag, size = 0x8, scoped, tag = 'scoped memory for tpu_custom_call.1']
    #allocation5 [shape = 'u8[16384]{0}', space=vmem, size = 0x4000, scoped, tag = 'output window, operand 0']
    %6 = vsyncpa [#allocation3], 0
    %s7 = scalar_lea.sflag [#allocation3], 1
    %8 = vsyncpa %s7, 0
    %9 = vsyncpa [#allocation4], 0
    %s10 = scalar_lea.sflag [#allocation4], 1
    %11 = vsyncpa %s10, 0
    loop: start=0, step=1, limit=4
    $region2: #{tpu_custom_call.1} parent=1 // loop_pre_header
      _
    $region3: #{tpu_custom_call.1} parent=1 // loop_header
      %s13 = sphi 0, %s17
      %p14 = scmp.ge.s32.totalorder %s13, 4
      %s20 = sphi 0, %s32
      %s21 = sphi 0, %s28
      %s22 = sphi 0, %s20
      %s23 = sphi 0, %s21
      %s24 = sphi 0, %s22
      %s25 = sphi 0, %s23
      %s37 = sphi 0, %s39
      %s40 = sphi 0, %s37
      %s41 = sphi 0, %s40
      %s57 = sphi 0, %s41
      %s65 = sphi 0, %s67
      %s68 = sphi 0, %s65
      %s69 = sphi 0, %s68
      %s85 = sphi 0, %s69
    $region4: #{tpu_custom_call.1} parent=1 // loop_header_branch
      %16 = sbr.rel (%p14) target = $region8
    $region5: #{tpu_custom_call.1} parent=1 // loop_body
      %s18 = ssub.s32 %s13, 1
      %s19 = ssub.s32 %s13, 2
      %s26 = sadd.s32 1, %s21
      %p27 = scmp.ge.s32.totalorder %s26, 1
      %s28 = scalar_select %p27, 0, %s26
      %s29 = sadd.s32 1, %s20
      %s30 = scalar_select %p27, %s29, %s20
      %p31 = scmp.ge.s32.totalorder %s30, 2
      %s32 = scalar_select %p31, 0, %s30
      %s33 = ssub.s32 %s20, %s32
      %s34 = ssub.s32 %s21, %s28
      %s35 = sor.u32 %s33, %s34
      %p36 = scmp.eq.s32.totalorder %s35, 0
      %s38 = sadd.s32 %s37, 1
      %s39 = scalar_select %p36, %s37, %s38
      %p42 = pneg %p36
      %p43 = scmp.eq.s32.totalorder %s13, 1
      %p44 = por %p42, %p43
      %p45 = scmp.ne.s32.totalorder %s37, %s40
      %p46 = scmp.eq.s32.totalorder %s13, 0
      %p47 = por %p45, %p46
      %p48 = scmp.ne.s32.totalorder %s37, %s40
      %p49 = scmp.eq.s32.totalorder %s18, 1
      %p50 = por %p48, %p49
      %p51 = scmp.ne.s32.totalorder %s40, %s41
      %p52 = scmp.eq.s32.totalorder %s18, 0
      %p53 = por %p51, %p52
      %p54 = scmp.ne.s32.totalorder %s40, %s41
      %p55 = scmp.eq.s32.totalorder %s19, 1
      %p56 = por %p54, %p55
      %p58 = scmp.ne.s32.totalorder %s41, %s57
      %p59 = scmp.eq.s32.totalorder %s19, 0
      %p60 = por %p58, %p59
      %s61 = ssub.s32 %s20, %s32
      %s62 = ssub.s32 %s21, %s28
      %s63 = sor.u32 %s61, %s62
      %p64 = scmp.eq.s32.totalorder %s63, 0
      %s66 = sadd.s32 %s65, 1
      %s67 = scalar_select %p64, %s65, %s66
      %p70 = pneg %p64
      %p71 = scmp.eq.s32.totalorder %s13, 1
      %p72 = por %p70, %p71
      %p73 = scmp.ne.s32.totalorder %s65, %s68
      %p74 = scmp.eq.s32.totalorder %s13, 0
      %p75 = por %p73, %p74
      %p76 = scmp.ne.s32.totalorder %s65, %s68
      %p77 = scmp.eq.s32.totalorder %s18, 1
      %p78 = por %p76, %p77
      %p79 = scmp.ne.s32.totalorder %s68, %s69
      %p80 = scmp.eq.s32.totalorder %s18, 0
      %p81 = por %p79, %p80
      %p82 = scmp.ne.s32.totalorder %s68, %s69
      %p83 = scmp.eq.s32.totalorder %s19, 1
      %p84 = por %p82, %p83
      %p86 = scmp.ne.s32.totalorder %s69, %s85
      %p87 = scmp.eq.s32.totalorder %s19, 0
      %p88 = por %p86, %p87
      %p89 = scmp.le.s32.totalorder 1, %s13
      %p90 = scmp.lt.s32.totalorder %s13, 3
      %p91 = pnand %p89, %p90
      %p92 = pneg %p91
      // Predicated region
      $region9: #{tpu_custom_call.1} parent=5 // pred_check
        _
      $region10: #{tpu_custom_call.1} parent=5 // pred_check_branch
        %94 = sbr.rel (%p91) target = $region12
      $region11: #{tpu_custom_call.1} parent=5 // pred_region
        %s95 = ssub.s32 %s13, 1
      $region12: #{tpu_custom_call.1} parent=5 // pred_fallthru
        _
      %p96 = scmp.lt.s32.totalorder %s13, 2
      // Predicated region
      $region13: #{tpu_custom_call.1} parent=5 // pred_check
        %p97 = pneg %p96
      $region14: #{tpu_custom_call.1} parent=5 // pred_check_branch
        %99 = sbr.rel (%p97) target = $region16
      $region15: #{tpu_custom_call.1} parent=5 // pred_region
        // Predicated region
        $region17: #{tpu_custom_call.1} parent=15 // pred_check
          %p100 = pneg %p47
        $region18: #{tpu_custom_call.1} parent=15 // pred_check_branch
          %102 = sbr.rel (%p100) target = $region20
        $region19: #{tpu_custom_call.1} parent=15 // pred_region
          %s103 = sand.u32 %s37, 1
          %s104 = scalar_lea.sflag [#allocation3], %s103
          %s105 = sand.u32 %s37, 1
          %s106 = smul.addr %s105, 32
          %s107 = scalar_lea.vmem [#allocation2], %s106
          %s108 = smul.u32 2, %s21
          %s110 = ssub.s32 512, 512
          %111 = vsyncadd %s104, %s110
          %s112 = smul.addr %s20, 4
          %s113 = sadd.s32 %s108, %s112
          %s114 = smul.addr %s113, 128
          %s115 = scalar_lea.hbm %s0, %s114
          %s116 = sshll.u32 %s107, 4
          %s117 = int_to_ptr.vmem [resolvable:$true] %s116
          %122 = dma.hbm_to_vmem [thread:$0]  %s115, 512, %s117, %s104, 256, 256, 16
        $region20: #{tpu_custom_call.1} parent=15 // pred_fallthru
          _
      $region16: #{tpu_custom_call.1} parent=5 // pred_fallthru
        _
      %p123 = scmp.le.s32.totalorder 1, %s13
      %p124 = scmp.lt.s32.totalorder %s13, 3
      %p125 = pnand %p123, %p124
      %p126 = pneg %p125
      // Predicated region
      $region21: #{tpu_custom_call.1} parent=5 // pred_check
        _
      $region22: #{tpu_custom_call.1} parent=5 // pred_check_branch
        %128 = sbr.rel (%p125) target = $region24
      $region23: #{tpu_custom_call.1} parent=5 // pred_region
        %s129 = ssub.s32 %s13, 1
        %s130 = sand.u32 %s40, 1
        %s131 = scalar_lea.sflag [#allocation3], %s130
        %s132 = sand.u32 %s40, 1
        %s133 = smul.addr %s132, 32
        %s134 = scalar_lea.vmem [#allocation2], %s133
        // Predicated region
        $region25: #{tpu_custom_call.1} parent=23 // pred_check
          %p135 = pneg %p53
        $region26: #{tpu_custom_call.1} parent=23 // pred_check_branch
          %137 = sbr.rel (%p135) target = $region28
        $region27: #{tpu_custom_call.1} parent=23 // pred_region
          %138 = dma.done %s131, 512
        $region28: #{tpu_custom_call.1} parent=23 // pred_fallthru
          _
        %s139 = sand.u32 %s40, 1
        %s140 = scalar_lea.sflag [#allocation3], %s139
        %s141 = sand.u32 %s40, 1
        %s142 = smul.addr %s141, 32
        %s143 = scalar_lea.vmem [#allocation2], %s142
        %p144 = pneg %p53
        %p145 = pneg %p50
        %p146 = pneg %p81
        %p147 = pneg %p78
        %s148 = sand.u32 %s68, 1
        %s149 = scalar_lea.sflag [#allocation4], %s148
        %s150 = sand.u32 %s68, 1
        %s151 = smul.addr %s150, 16
        %s152 = scalar_lea.vmem [#allocation5], %s151
        %s153 = smul.u32 2, %s23
        %s154 = smul.u32 2, %s23
        %v155 = vld [vmem:[%s134] sm:$0xff]
        %v156 = vld [vmem:[%s134 + $0x8] sm:$0xff]
        %v157 = vld [vmem:[%s134 + $0x10] sm:$0xff]
        %v158 = vld [vmem:[%s134 + $0x18] sm:$0xff]
        %vm163 = vcmask 1040384
        %v164 = vrot.slane %v155, 7
        %v165 = vrot.slane %v156, 7
        %v166 = vrot.slane %v157, 7
        %v167 = vsel %vm163, %v164, %v166
        %v168 = vrot.slane %v158, 7
        %v169 = vsel %vm163, %v165, %v168
        %v174 = vsel %vm163, -3.4028235e+38, %v164
        %v175 = vsel %vm163, -3.4028235e+38, %v165
        %vm178 = vcmask 1046528
        %v179 = vrot.slane %v174, 1
        %v180 = vrot.slane %v167, 1
        %v181 = vsel %vm178, %v179, %v180
        %v182 = vrot.slane %v175, 1
        %v183 = vrot.slane %v169, 1
        %v184 = vsel %vm178, %v182, %v183
        %v185 = vrot.slane %v166, 1
        %v186 = vsel %vm178, %v180, %v185
        %v187 = vrot.slane %v168, 1
        %v188 = vsel %vm178, %v183, %v187
        %v193 = vmax.f32 %v174, %v181
        %v194 = vmax.f32 %v175, %v184
        %v195 = vmax.f32 %v167, %v186
        %v196 = vmax.f32 %v169, %v188
        %v201 = vcombine.low %v193, %v194
        %v202 = vcombine.high %v193, %v194
        %v204 = vunpack.c.l.s4 1983009808
        %v205 = vunpack.c.0.s8 %v204
        %v206 = vlaneseq
        %v207 = vshrl.u32 %v206, 7
        %v208 = vsub.s32 %v205, %v207
        %v209 = vrot.slane %v201, %v208
        %v211 = vunpack.c.l.s4 1983009808
        %v212 = vunpack.c.0.s8 %v211
        %v213 = vlaneseq
        %v214 = vshrl.u32 %v213, 7
        %v215 = vsub.s32 %v212, %v214
        %v216 = vrot.slane %v202, %v215
        %v217 = vcombine.high %v209, %v209
        %v218 = vcombine.high %v216, %v216
        %v219 = vcombine.low %v195, %v196
        %v220 = vcombine.high %v195, %v196
        %v222 = vunpack.c.l.s4 1983009808
        %v223 = vunpack.c.0.s8 %v222
        %v224 = vlaneseq
        %v225 = vshrl.u32 %v224, 7
        %v226 = vsub.s32 %v223, %v225
        %v227 = vrot.slane %v219, %v226
        %v229 = vunpack.c.l.s4 1983009808
        %v230 = vunpack.c.0.s8 %v229
        %v231 = vlaneseq
        %v232 = vshrl.u32 %v231, 7
        %v233 = vsub.s32 %v230, %v232
        %v234 = vrot.slane %v220, %v233
        %v235 = vcombine.high %v227, %v227
        %v236 = vcombine.high %v234, %v234
        %v238 = vunpack.c.l.s4 1983009808
        %v239 = vunpack.c.0.s8 %v238
        %v240 = vlaneseq
        %v241 = vshrl.u32 %v240, 7
        %v242 = vsub.s32 %v239, %v241
        %v243 = vrot.slane %v209, %v242
        %v244 = vcombine.high %v243, %v243
        %v246 = vunpack.c.l.s4 1983009808
        %v247 = vunpack.c.0.s8 %v246
        %v248 = vlaneseq
        %v249 = vshrl.u32 %v248, 7
        %v250 = vsub.s32 %v247, %v249
        %v251 = vrot.slane %v217, %v250
        %v252 = vcombine.high %v251, %v251
        %v254 = vunpack.c.l.s4 1983009808
        %v255 = vunpack.c.0.s8 %v254
        %v256 = vlaneseq
        %v257 = vshrl.u32 %v256, 7
        %v258 = vsub.s32 %v255, %v257
        %v259 = vrot.slane %v216, %v258
        %v260 = vcombine.high %v259, %v259
        %v262 = vunpack.c.l.s4 1983009808
        %v263 = vunpack.c.0.s8 %v262
        %v264 = vlaneseq
        %v265 = vshrl.u32 %v264, 7
        %v266 = vsub.s32 %v263, %v265
        %v267 = vrot.slane %v218, %v266
        %v268 = vcombine.high %v267, %v267
        %v270 = vunpack.c.l.s4 1983009808
        %v271 = vunpack.c.0.s8 %v270
        %v272 = vlaneseq
        %v273 = vshrl.u32 %v272, 7
        %v274 = vsub.s32 %v271, %v273
        %v275 = vrot.slane %v227, %v274
        %v276 = vcombine.high %v275, %v275
        %v278 = vunpack.c.l.s4 1983009808
        %v279 = vunpack.c.0.s8 %v278
        %v280 = vlaneseq
        %v281 = vshrl.u32 %v280, 7
        %v282 = vsub.s32 %v279, %v281
        %v283 = vrot.slane %v235, %v282
        %v284 = vcombine.high %v283, %v283
        %v286 = vunpack.c.l.s4 1983009808
        %v287 = vunpack.c.0.s8 %v286
        %v288 = vlaneseq
        %v289 = vshrl.u32 %v288, 7
        %v290 = vsub.s32 %v287, %v289
        %v291 = vrot.slane %v234, %v290
        %v292 = vcombine.high %v291, %v291
        %v294 = vunpack.c.l.s4 1983009808
        %v295 = vunpack.c.0.s8 %v294
        %v296 = vlaneseq
        %v297 = vshrl.u32 %v296, 7
        %v298 = vsub.s32 %v295, %v297
        %v299 = vrot.slane %v236, %v298
        %v300 = vcombine.high %v299, %v299
        %vm317 = vcmask 1041408
        %v318 = vsel %vm317, %v243, -inf
        %v319 = vrot.slane %v318, 4
        %v320 = vmax.f32 %v318, %v319
        %v321 = vrot.slane %v320, 2
        %v322 = vmax.f32 %v320, %v321
        %v323 = vrot.slane %v322, 1
        %v324 = vmax.f32 %v322, %v323
        %v325 = vsel %vm317, %v244, -inf
        %v326 = vrot.slane %v325, 4
        %v327 = vmax.f32 %v325, %v326
        %v328 = vrot.slane %v327, 2
        %v329 = vmax.f32 %v327, %v328
        %v330 = vrot.slane %v329, 1
        %v331 = vmax.f32 %v329, %v330
        %v332 = vsel %vm317, %v251, -inf
        %v333 = vrot.slane %v332, 4
        %v334 = vmax.f32 %v332, %v333
        %v335 = vrot.slane %v334, 2
        %v336 = vmax.f32 %v334, %v335
        %v337 = vrot.slane %v336, 1
        %v338 = vmax.f32 %v336, %v337
        %v339 = vsel %vm317, %v252, -inf
        %v340 = vrot.slane %v339, 4
        %v341 = vmax.f32 %v339, %v340
        %v342 = vrot.slane %v341, 2
        %v343 = vmax.f32 %v341, %v342
        %v344 = vrot.slane %v343, 1
        %v345 = vmax.f32 %v343, %v344
        %v346 = vsel %vm317, %v259, -inf
        %v347 = vrot.slane %v346, 4
        %v348 = vmax.f32 %v346, %v347
        %v349 = vrot.slane %v348, 2
        %v350 = vmax.f32 %v348, %v349
        %v351 = vrot.slane %v350, 1
        %v352 = vmax.f32 %v350, %v351
        %v353 = vsel %vm317, %v260, -inf
        %v354 = vrot.slane %v353, 4
        %v355 = vmax.f32 %v353, %v354
        %v356 = vrot.slane %v355, 2
        %v357 = vmax.f32 %v355, %v356
        %v358 = vrot.slane %v357, 1
        %v359 = vmax.f32 %v357, %v358
        %v360 = vsel %vm317, %v267, -inf
        %v361 = vrot.slane %v360, 4
        %v362 = vmax.f32 %v360, %v361
        %v363 = vrot.slane %v362, 2
        %v364 = vmax.f32 %v362, %v363
        %v365 = vrot.slane %v364, 1
        %v366 = vmax.f32 %v364, %v365
        %v367 = vsel %vm317, %v268, -inf
        %v368 = vrot.slane %v367, 4
        %v369 = vmax.f32 %v367, %v368
        %v370 = vrot.slane %v369, 2
        %v371 = vmax.f32 %v369, %v370
        %v372 = vrot.slane %v371, 1
        %v373 = vmax.f32 %v371, %v372
        %v374 = vsel %vm317, %v275, -inf
        %v375 = vrot.slane %v374, 4
        %v376 = vmax.f32 %v374, %v375
        %v377 = vrot.slane %v376, 2
        %v378 = vmax.f32 %v376, %v377
        %v379 = vrot.slane %v378, 1
        %v380 = vmax.f32 %v378, %v379
        %v381 = vsel %vm317, %v276, -inf
        %v382 = vrot.slane %v381, 4
        %v383 = vmax.f32 %v381, %v382
        %v384 = vrot.slane %v383, 2
        %v385 = vmax.f32 %v383, %v384
        %v386 = vrot.slane %v385, 1
        %v387 = vmax.f32 %v385, %v386
        %v388 = vsel %vm317, %v283, -inf
        %v389 = vrot.slane %v388, 4
        %v390 = vmax.f32 %v388, %v389
        %v391 = vrot.slane %v390, 2
        %v392 = vmax.f32 %v390, %v391
        %v393 = vrot.slane %v392, 1
        %v394 = vmax.f32 %v392, %v393
        %v395 = vsel %vm317, %v284, -inf
        %v396 = vrot.slane %v395, 4
        %v397 = vmax.f32 %v395, %v396
        %v398 = vrot.slane %v397, 2
        %v399 = vmax.f32 %v397, %v398
        %v400 = vrot.slane %v399, 1
        %v401 = vmax.f32 %v399, %v400
        %v402 = vsel %vm317, %v291, -inf
        %v403 = vrot.slane %v402, 4
        %v404 = vmax.f32 %v402, %v403
        %v405 = vrot.slane %v404, 2
        %v406 = vmax.f32 %v404, %v405
        %v407 = vrot.slane %v406, 1
        %v408 = vmax.f32 %v406, %v407
        %v409 = vsel %vm317, %v292, -inf
        %v410 = vrot.slane %v409, 4
        %v411 = vmax.f32 %v409, %v410
        %v412 = vrot.slane %v411, 2
        %v413 = vmax.f32 %v411, %v412
        %v414 = vrot.slane %v413, 1
        %v415 = vmax.f32 %v413, %v414
        %v416 = vsel %vm317, %v299, -inf
        %v417 = vrot.slane %v416, 4
        %v418 = vmax.f32 %v416, %v417
        %v419 = vrot.slane %v418, 2
        %v420 = vmax.f32 %v418, %v419
        %v421 = vrot.slane %v420, 1
        %v422 = vmax.f32 %v420, %v421
        %v423 = vsel %vm317, %v300, -inf
        %v424 = vrot.slane %v423, 4
        %v425 = vmax.f32 %v423, %v424
        %v426 = vrot.slane %v425, 2
        %v427 = vmax.f32 %v425, %v426
        %v428 = vrot.slane %v427, 1
        %v429 = vmax.f32 %v427, %v428
        %vm446 = vcmask 1041409
        %v447 = vsel %vm446, %v338, %v324
        %vm448 = vcmask 1042434
        %v449 = vsel %vm448, %v352, %v447
        %vm450 = vcmask 1043459
        %v451 = vsel %vm450, %v366, %v449
        %vm452 = vcmask 1044484
        %v453 = vsel %vm452, %v380, %v451
        %vm454 = vcmask 1045509
        %v455 = vsel %vm454, %v394, %v453
        %vm456 = vcmask 1046534
        %v457 = vsel %vm456, %v408, %v455
        %vm458 = vcmask 1047559
        %v459 = vsel %vm458, %v422, %v457
        %v460 = vsel %vm446, %v345, %v331
        %v461 = vsel %vm448, %v359, %v460
        %v462 = vsel %vm450, %v373, %v461
        %v463 = vsel %vm452, %v387, %v462
        %v464 = vsel %vm454, %v401, %v463
        %v465 = vsel %vm456, %v415, %v464
        %v466 = vsel %vm458, %v429, %v465
        %469 = vst [vmem:[%s152] sm:$0xff] %v459
        %470 = vst [vmem:[%s152 + $0x8] sm:$0xff] %v466
        %s471 = sand.u32 %s68, 1
        %s472 = scalar_lea.sflag [#allocation4], %s471
        %s473 = sand.u32 %s68, 1
        %s474 = smul.addr %s473, 16
        %s475 = scalar_lea.vmem [#allocation5], %s474
        // Predicated region
        $region29: #{tpu_custom_call.1} parent=23 // pred_check
          %p476 = pneg %p78
        $region30: #{tpu_custom_call.1} parent=23 // pred_check_branch
          %478 = sbr.rel (%p476) target = $region32
        $region31: #{tpu_custom_call.1} parent=23 // pred_region
          %s479 = smul.u32 2, %s23
          %s481 = ssub.s32 256, 256
          %482 = vsyncadd %s472, %s481
          %s483 = smul.addr %s22, 2
          %s484 = sadd.s32 %s479, %s483
          %s485 = smul.addr %s484, 128
          %s486 = scalar_lea.hbm %s1, %s485
          %s488 = sshll.u32 %s475, 4
          %s489 = int_to_ptr.vmem [resolvable:$true] %s488
          %491 = dma.vmem_to_hbm [thread:$0]  %s489, 256, %s486, %s472
        $region32: #{tpu_custom_call.1} parent=23 // pred_fallthru
          _
      $region24: #{tpu_custom_call.1} parent=5 // pred_fallthru
        _
      %p492 = scmp.le.s32.totalorder 2, %s13
      // Predicated region
      $region33: #{tpu_custom_call.1} parent=5 // pred_check
        %p493 = pneg %p492
      $region34: #{tpu_custom_call.1} parent=5 // pred_check_branch
        %495 = sbr.rel (%p493) target = $region36
      $region35: #{tpu_custom_call.1} parent=5 // pred_region
        %s496 = ssub.s32 %s13, 2
        // Predicated region
        $region37: #{tpu_custom_call.1} parent=35 // pred_check
          %p497 = pneg %p84
        $region38: #{tpu_custom_call.1} parent=35 // pred_check_branch
          %499 = sbr.rel (%p497) target = $region40
        $region39: #{tpu_custom_call.1} parent=35 // pred_region
          %s500 = sand.u32 %s69, 1
          %s501 = scalar_lea.sflag [#allocation4], %s500
          %s502 = sand.u32 %s69, 1
          %s503 = smul.addr %s502, 16
          %s504 = scalar_lea.vmem [#allocation5], %s503
          %505 = dma.done %s501, 256
        $region40: #{tpu_custom_call.1} parent=35 // pred_fallthru
          _
      $region36: #{tpu_custom_call.1} parent=5 // pred_fallthru
        _
    $region6: #{tpu_custom_call.1} parent=1 // loop_footer
      %s17 = sadd.s32 1, %s13
    $region7: #{tpu_custom_call.1} parent=1 // loop_footer_branch
      %12 = sbr.rel target = $region3
    $region8: #{tpu_custom_call.1} parent=1 // loop_exit
      _
    %506 = vsyncpa [#allocation3], 1
    %s507 = scalar_lea.sflag [#allocation3], 1
    %508 = vsyncpa %s507, 1
    %509 = vsyncpa [#allocation4], 1
    %s510 = scalar_lea.sflag [#allocation4], 1
    %511 = vsyncpa %s510, 1

</llo_original>
